<compile_context>
chip_gen: v7x
topology: tpu7x:2x2x1
jax: 0.10.0
libtpu: 0.0.40
codegen_flags: <defaults>
</compile_context>

<pallas_src>
import jax
import jax.numpy as jnp
from jax import lax
from jax.experimental import pallas as pl
from jax.experimental.pallas import tpu as pltpu

_EPS = 1e-6


def _rmsnorm_kernel(x_ref, w_ref, o_ref):
    # x_ref: (TM, H) tile of rows, w_ref: (1, H) scale, o_ref: (TM, H)
    xf = x_ref[...].astype(jnp.float32)
    mean_sq = jnp.mean(xf * xf, axis=-1, keepdims=True)       # (TM, 1), f32 accumulate
    inv = lax.rsqrt(mean_sq + _EPS)                            # EUP rsqrt
    w = w_ref[...].astype(jnp.float32)                         # (1, H)
    # Re-read x for the final scale: the f32 upcast used in the reduction does
    # not need to stay live across it (reduces vreg/VMEM pressure for bf16).
    o_ref[...] = ((x_ref[...].astype(jnp.float32) * inv) * w).astype(o_ref.dtype)


def _vmem_capacity_bytes():
    """Physical VMEM of the current chip (v5e/v6e: 128 MiB, v7x: 64 MiB)."""
    try:
        return int(pltpu.get_tpu_info().vmem_capacity_bytes)
    except Exception:
        return 128 * 1024 * 1024


def _pick_tile_rows(rows, hidden, itemsize):
    """Largest sublane-aligned row tile such that double-buffered in/out tiles
    plus the f32 intermediates fit in ~37.5% of this generation's VMEM, while
    guaranteeing at least 2 (preferably an even number of) grid programs so
    both v7x TensorCores get work."""
    sublane = max(8, 32 // itemsize)          # 8 for f32, 16 for bf16, 32 for int8
    if rows <= 2 * sublane:
        return rows                            # single full block (always legal)

    budget = (3 * _vmem_capacity_bytes()) // 8          # ~37.5% of physical VMEM
    # 2 input buffers + 2 output buffers (native dtype) + f32 upcast + f32 result
    per_row_bytes = 4 * hidden * itemsize + 2 * hidden * 4
    t = max(sublane, (budget // max(per_row_bytes, 1)) // sublane * sublane)

    # Cap at ~half the rows -> at least 2 programs, so both v7x TCs stream HBM.
    half = max(sublane, (pl.cdiv(rows, 2) // sublane) * sublane)
    t = min(t, half)

    # Prefer an even number of grid programs (balanced 2-TC split, no odd tail).
    n = pl.cdiv(rows, t)
    if n > 1 and n % 2 == 1:
        t2 = max(sublane, ((pl.cdiv(rows, n + 1) + sublane - 1) // sublane) * sublane)
        if pl.cdiv(rows, t2) % 2 == 0:
            t = t2
    return t


def rmsnorm(x, w, *, tile_rows=None):
    """x: (batch, seq, hidden), w: (hidden,) -> (batch, seq, hidden)"""
    B, S, H = x.shape
    rows = B * S
    x2d = x.reshape(rows, H)
    w2d = w.reshape(1, H)

    itemsize = jnp.dtype(x.dtype).itemsize
    if tile_rows is None:
        tile_rows = _pick_tile_rows(rows, H, itemsize)
    tile_rows = min(tile_rows, rows)

    grid = (pl.cdiv(rows, tile_rows),)        # ragged last block OK, no padding copies

    # Explicit scoped-VMEM request: double-buffered in + out tiles, the f32
    # intermediates, and the small weight block, with 2x headroom; capped at
    # ~75% of physical VMEM so Mosaic internal scratch fits on v7x (64 MiB).
    tile_bytes = tile_rows * H * itemsize
    f32_tile_bytes = tile_rows * H * 4
    vmem_needed = 4 * tile_bytes + 2 * f32_tile_bytes + 4 * H * max(itemsize, 4)
    vmem_cap = (3 * _vmem_capacity_bytes()) // 4
    vmem_limit = int(min(vmem_cap, max(2 * vmem_needed, 32 * 1024 * 1024)))

    # TODO(synk): for hidden sizes not a multiple of 128, a wrapper-side lane pad
    # would make stores fully lane-dense; real model sizes (768/1024/4096) are fine.
    out2d = pl.pallas_call(
        _rmsnorm_kernel,
        out_shape=jax.ShapeDtypeStruct((rows, H), x.dtype),
        grid_spec=pltpu.PrefetchScalarGridSpec(
            num_scalar_prefetch=0,
            grid=grid,
            in_specs=[
                pl.BlockSpec((tile_rows, H), lambda i: (i, 0)),
                pl.BlockSpec((1, H), lambda i: (0, 0)),
            ],
            out_specs=pl.BlockSpec((tile_rows, H), lambda i: (i, 0)),
        ),
        compiler_params=pltpu.CompilerParams(
            dimension_semantics=("parallel",),
            vmem_limit_bytes=vmem_limit,
        ),
    )(x2d, w2d)

    return out2d.reshape(B, S, H)


def _ref_rmsnorm(x, w):
    mean_sq = jnp.mean(x.astype(jnp.float32) ** 2, axis=-1, keepdims=True)
    return (w * (x / jnp.sqrt(mean_sq + _EPS))).astype(x.dtype)


if __name__ == "__main__":
    key = jax.random.PRNGKey(0)
    batch, seq, hidden = 2, 8, 32
    x = jax.random.normal(key, (batch, seq, hidden), dtype=jnp.float32)
    # nn.Parameter(torch.ones(hidden_size)) -> deterministic ones init
    w = jnp.ones((hidden,), dtype=jnp.float32)

    out = jax.block_until_ready(rmsnorm(x, w))
    assert out.shape == (batch, seq, hidden)
    assert jnp.allclose(out, _ref_rmsnorm(x, w), atol=1e-5, rtol=1e-5)

    # Ragged-grid path check (rows not divisible by tile_rows; no padding copies).
    x3 = jax.random.normal(jax.random.PRNGKey(1), (3, 5, hidden), dtype=jnp.float32)
    out3 = jax.block_until_ready(rmsnorm(x3, w, tile_rows=8))
    assert jnp.allclose(out3, _ref_rmsnorm(x3, w), atol=1e-5, rtol=1e-5)

    # Multi-program path via the automatic tiler (rows > 2*sublane -> grid >= 2).
    x4 = jax.random.normal(jax.random.PRNGKey(2), (4, 32, hidden), dtype=jnp.float32)
    out4 = jax.block_until_ready(rmsnorm(x4, w))
    assert jnp.allclose(out4, _ref_rmsnorm(x4, w), atol=1e-5, rtol=1e-5)

    print("KERNEL_OK")
</pallas_src>

<mosaic_0001>
module attributes {stable_mosaic.version = 11 : i64} {
  func.func @_rmsnorm_kernel(%arg0: i32, %arg1: memref<16x32xf32, #tpu.memory_space<vmem>>, %arg2: memref<1x32xf32, #tpu.memory_space<vmem>>, %arg3: memref<16x32xf32, #tpu.memory_space<vmem>>) attributes {dimension_semantics = [#tpu.dimension_semantics<parallel>], iteration_bounds = array<i64: 1>, scalar_prefetch = 0 : i64, scratch_operands = 0 : i64, tpu.core_type = #tpu.core_type<tc>, window_params = [{transform_indices = @transform_0, window_bounds = array<i64: 16, 32>}, {pipeline_mode = #tpu.pipeline_mode<synchronous>, transform_indices = @transform_1, window_bounds = array<i64: 1, 32>}, {transform_indices = @transform_2, window_bounds = array<i64: 16, 32>}]} {
    %c0 = arith.constant 0 : index
    %c0_0 = arith.constant 0 : index
    %0 = vector.load %arg1[%c0, %c0_0] : memref<16x32xf32, #tpu.memory_space<vmem>>, vector<16x32xf32>
    %1 = arith.mulf %0, %0 : vector<16x32xf32>
    %cst = arith.constant dense<0.000000e+00> : vector<16xf32>
    %2 = vector.multi_reduction <add>, %1, %cst [1] : vector<16x32xf32> to vector<16xf32>
    %3 = vector.shape_cast %2 : vector<16xf32> to vector<16x1xf32>
    %cst_1 = arith.constant 3.200000e+01 : f32
    %4 = vector.broadcast %cst_1 : f32 to vector<16x1xf32>
    %5 = arith.divf %3, %4 : vector<16x1xf32>
    %cst_2 = arith.constant 9.99999997E-7 : f32
    %6 = vector.broadcast %cst_2 : f32 to vector<16x1xf32>
    %7 = arith.addf %5, %6 : vector<16x1xf32>
    %8 = math.rsqrt %7 : vector<16x1xf32>
    %c0_3 = arith.constant 0 : index
    %c0_4 = arith.constant 0 : index
    %9 = vector.load %arg2[%c0_3, %c0_4] : memref<1x32xf32, #tpu.memory_space<vmem>>, vector<1x32xf32>
    %c0_5 = arith.constant 0 : index
    %c0_6 = arith.constant 0 : index
    %10 = vector.load %arg1[%c0_5, %c0_6] : memref<16x32xf32, #tpu.memory_space<vmem>>, vector<16x32xf32>
    %11 = vector.broadcast %8 : vector<16x1xf32> to vector<16x32xf32>
    %12 = arith.mulf %10, %11 : vector<16x32xf32>
    %13 = vector.broadcast %9 : vector<1x32xf32> to vector<16x32xf32>
    %14 = arith.mulf %12, %13 : vector<16x32xf32>
    %c0_7 = arith.constant 0 : index
    %c0_8 = arith.constant 0 : index
    %15 = vector.load %arg3[%c0_7, %c0_8] : memref<16x32xf32, #tpu.memory_space<vmem>>, vector<16x32xf32>
    tpu.vector_store %arg3[%c0_7, %c0_8], %14 {strides = array<i32>} : memref<16x32xf32, #tpu.memory_space<vmem>>, vector<16x32xf32>,
    return
  }
  func.func @transform_0(%arg0: i32) -> (i32, i32) {
    %c0_i32 = arith.constant 0 : i32
    %c0_i32_0 = arith.constant 0 : i32
    return %arg0, %c0_i32 : i32, i32
  }
  func.func @transform_1(%arg0: i32) -> (i32, i32) {
    %c0_i32 = arith.constant 0 : i32
    %c0_i32_0 = arith.constant 0 : i32
    %c0_i32_1 = arith.constant 0 : i32
    return %c0_i32, %c0_i32_0 : i32, i32
  }
  func.func @transform_2(%arg0: i32) -> (i32, i32) {
    %c0_i32 = arith.constant 0 : i32
    %c0_i32_0 = arith.constant 0 : i32
    return %arg0, %c0_i32 : i32, i32
  }
}

</mosaic_0001>

<llo_original>
// kernel: tpu_custom_call.1
$region0: #{tpu_custom_call.1}
  #allocation0 [shape = 'u32[]', space=smem, size = 0x4, offset = 0x4, fixed_abs, tag = 'smem constant byte address 0x4 - core index']
  #allocation1 [shape = 'u32[144,128]{1,0:T(1,128)}', space=vmem, size = 0x12000, scoped, tag = 'internal scratch']
  %s0 = inlined_call_operand.hbm [shape: f32[16,32], index: 0, kind: input, shape index: {}]
  %s1 = inlined_call_operand.vmem [shape: f32[1,32], index: 1, kind: input, shape index: {}]
  %s2 = inlined_call_operand.hbm [shape: f32[16,32], index: 2, kind: output, shape index: {}]
  %s3 = sld [smem:[#allocation0]]
  $region22: #{tpu_custom_call.1} parent=0
    _
  %s5 = ssub.s32 1, %s3
  %s6 = scalar_select 0, %s5, %s3
  $region1: #{tpu_custom_call.1} parent=0
    #allocation2 [shape = 'u8[8192]{0}', space=vmem, size = 0x2000, scoped, tag = 'input window, operand 0, single buffered']
    #allocation3 [shape = 's32[1]{0}', space=sflag, size = 0x4, scoped, tag = 'scoped memory for tpu_custom_call.1']
    #allocation4 [shape = 's32[1]{0}', space=sflag, size = 0x4, scoped, tag = 'scoped memory for tpu_custom_call.1']
    #allocation5 [shape = 'u8[8192]{0}', space=vmem, size = 0x2000, scoped, tag = 'output window, operand 0, single buffered']
    %7 = vsyncpa [#allocation3], 0
    %8 = vsyncpa [#allocation4], 0
    // Predicated region
    $region2: #{tpu_custom_call.1} parent=1 // pred_check
      _
    $region3: #{tpu_custom_call.1} parent=1 // pred_check_branch
      %10 = sbr.rel (0) target = $region5
    $region4: #{tpu_custom_call.1} parent=1 // pred_region
      %s12 = ssub.s32 256, 256
      %13 = vsyncadd [#allocation3], %s12
      %s14 = sshll.u32 [#allocation2], 4
      %s15 = int_to_ptr.vmem [resolvable:$true] %s14
      %20 = dma.hbm_to_vmem [thread:$0]  %s0, 256, %s15, [#allocation3], 128, 128, 8
    $region5: #{tpu_custom_call.1} parent=1 // pred_fallthru
      _
    // Predicated region
    $region6: #{tpu_custom_call.1} parent=1 // pred_check
      _
    $region7: #{tpu_custom_call.1} parent=1 // pred_check_branch
      %22 = sbr.rel (0) target = $region9
    $region8: #{tpu_custom_call.1} parent=1 // pred_region
      _
    $region9: #{tpu_custom_call.1} parent=1 // pred_fallthru
      _
    // Predicated region
    $region10: #{tpu_custom_call.1} parent=1 // pred_check
      _
    $region11: #{tpu_custom_call.1} parent=1 // pred_check_branch
      %24 = sbr.rel (0) target = $region13
    $region12: #{tpu_custom_call.1} parent=1 // pred_region
      %25 = dma.done [#allocation3], 256
    $region13: #{tpu_custom_call.1} parent=1 // pred_fallthru
      _
    %v26 = vld [vmem:[#allocation2] sm:$0xff]
    %v27 = vld [vmem:[#allocation2 + $0x8] sm:$0xff]
    %v28 = vmul.f32 %v26, %v26
    %v29 = vmul.f32 %v27, %v27
    %vm30 = vcmask 261120
    %v31 = vsel %vm30, %v28, 0.0
    %32 = vadd.xlane.f32.xlu0 %v31
    %v33 = vpop.xlane.xlu0 %32
    %v34 = vsel %vm30, %v29, 0.0
    %35 = vadd.xlane.f32.xlu0 %v34
    %v36 = vpop.xlane.xlu0 %35
    %v37 = vrcp.pop 32.0
    %v38 = vmul.f32 %v33, %v37
    %v39 = vmul.f32 %v36, %v37
    %v40 = vadd.f32 %v38, 1e-06
    %v41 = vadd.f32 %v39, 1e-06
    %v42 = vrsqrt.pop %v40
    %v43 = vrsqrt.pop %v41
    %v44 = vld [vmem:[%s1] sm:$0x1]
    %v45 = vmul.f32 %v26, %v42
    %v46 = vmul.f32 %v27, %v43
    %v48 = vlaneseq
    %v49 = vshrl.u32 %v48, 7
    %v50 = vsub.s32 0, %v49
    %v51 = vrot.slane %v44, %v50
    %v53 = vmul.f32 %v45, %v51
    %v54 = vmul.f32 %v46, %v51
    %55 = vst.msk [vmem:[#allocation5] sm:$0xff] %vm30, %v53
    %56 = vst.msk [vmem:[#allocation5 + $0x8] sm:$0xff] %vm30, %v54
    // Predicated region
    $region14: #{tpu_custom_call.1} parent=1 // pred_check
      _
    $region15: #{tpu_custom_call.1} parent=1 // pred_check_branch
      %58 = sbr.rel (0) target = $region17
    $region16: #{tpu_custom_call.1} parent=1 // pred_region
      %s60 = ssub.s32 256, 256
      %61 = vsyncadd [#allocation4], %s60
      %s62 = sshll.u32 [#allocation5], 4
      %s63 = int_to_ptr.vmem [resolvable:$true] %s62
      %68 = dma.vmem_to_hbm [thread:$0]  %s63, 256, %s2, [#allocation4], 128, 128, 8
    $region17: #{tpu_custom_call.1} parent=1 // pred_fallthru
      _
    // Predicated region
    $region18: #{tpu_custom_call.1} parent=1 // pred_check
      _
    $region19: #{tpu_custom_call.1} parent=1 // pred_check_branch
      %70 = sbr.rel (0) target = $region21
    $region20: #{tpu_custom_call.1} parent=1 // pred_region
      %71 = dma.done [#allocation4], 256
    $region21: #{tpu_custom_call.1} parent=1 // pred_fallthru
      _
    %72 = vsyncpa [#allocation3], 1
    %73 = vsyncpa [#allocation4], 1

</llo_original>
